<compile_context>
chip_gen: v5e
topology: v5e:2x2
jax: 0.10.0
libtpu: 0.0.40
codegen_flags: <defaults>
</compile_context>

<pallas_src>
import warnings
import numpy as np
import jax
import jax.numpy as jnp
from jax.experimental import pallas as pl
from jax.experimental.pallas import tpu as pltpu


# ----------------------------------------------------------------------------
# Synapse construction (glue, mirrors the PyTorch helper functions, numpy RNG)
# ----------------------------------------------------------------------------
def brain_region(neuron_num):
    regions, start = [], 0
    for n in neuron_num:
        regions.append((start, start + n))
        start += n
    return regions


def syn_within_region(rng, syn_num, regions):
    parts = []
    for (a, b) in regions:
        parts.append(rng.randint(a, b, size=((b - a) * syn_num, 2)))
    return np.concatenate(parts, axis=0)


def syn_cross_region(rng, weight_matrix, regions):
    parts = []
    for i in range(len(weight_matrix)):
        for j in range(len(weight_matrix)):
            w = int(weight_matrix[i][j])
            if w < 10:
                continue
            pre = rng.randint(regions[j][0], regions[j][1], size=(w, 1))
            post = rng.randint(regions[i][0], regions[i][1], size=(w, 1))
            parts.append(np.concatenate([post, pre], axis=1))
    return np.concatenate(parts, axis=0)


def build_dense_w(syn, weight, n):
    # torch.sparse_coo_tensor(syn.t(), weight) -> W[post, pre] += weight (dupes summed)
    w = np.zeros((n, n), dtype=np.float32)
    np.add.at(w, (syn[:, 0], syn[:, 1]), weight)
    return w


# ----------------------------------------------------------------------------
# Weight preparation — done ONCE, cached across timesteps
# ----------------------------------------------------------------------------
def prepare_weights(w):
    """Return Wt[j, i] = W[i, j], narrowed to bf16 when exactly representable."""
    wt = jnp.asarray(w, jnp.float32).T
    wt_bf16 = wt.astype(jnp.bfloat16)
    if bool(jnp.all(wt_bf16.astype(jnp.float32) == wt)):
        return wt_bf16
    warnings.warn("Syn weights are not bf16-exact; keeping f32 Wt "
                  "(dominant HBM stream doubles).")
    return wt


# ----------------------------------------------------------------------------
# Tiling / VMEM helpers
# ----------------------------------------------------------------------------
def _pick_tiles(n):
    """Large lane-dense tiles; prefer >=2 i-tiles so 'parallel' can use both TCs (v7x)."""
    if n % 128 != 0:
        return n, n  # tiny / irregular sizes: single whole-array block

    def largest_div(cands):
        for c in cands:
            if n % c == 0:
                return c
        return n

    ti = largest_div([1024, 512, 256, 128])
    if n // ti < 2 and n >= 256:
        ti = largest_div([c for c in (512, 256, 128) if n // c >= 2] or [n])
    tj = largest_div([1024, 512, 256, 128])
    return ti, tj


def _vmem_limit_bytes(resident_block_bytes):
    # double-buffered blocks + headroom, never below the 32 MiB scoped default
    return int(max(2 * resident_block_bytes + (8 << 20), 32 << 20))


# ----------------------------------------------------------------------------
# Fused single-timestep kernel: state update + I = r' @ Wt + Ieff
# ----------------------------------------------------------------------------
def make_fused_step_kernel(dt_over_tau, ieff_scale, mu, lamda_r, lamda_d,
                           inv_tao_d, dt, mxu_dtype):
    dt_over_tau = float(dt_over_tau)
    ieff_scale = float(ieff_scale)
    mu = float(mu)
    lamda_r = float(lamda_r)
    lamda_d = float(lamda_d)
    inv_tao_d = float(inv_tao_d)
    dt = float(dt)

    def kernel(iback_ref, noise_ref, spike_i_ref, s_i_ref, r_i_ref,
               spike_j_ref, s_j_ref, r_j_ref, wt_ref,
               i_ref, iback_out_ref, s_out_ref, r_out_ref):
        j = pl.program_id(1)

        # All four outputs are indexed by the i axis only -> resident across the
        # whole j reduction; initialize them once on the first j step.
        @pl.when(j == 0)
        def _():
            iback_new = iback_ref[...] + dt_over_tau * (noise_ref[...] - iback_ref[...])
            iback_out_ref[...] = iback_new
            i_ref[...] = iback_new * ieff_scale + mu          # I starts at Ieff
            s_i = s_i_ref[...] + lamda_r * (-s_i_ref[...] + inv_tao_d * spike_i_ref[...])
            s_out_ref[...] = s_i
            r_out_ref[...] = r_i_ref[...] - lamda_d * r_i_ref[...] + dt * s_i

        # Recompute r' for the current j-tile (trivial VPU work hidden under the Wt
        # DMA) and feed bf16 straight to the MXU with f32 accumulation — no Wt upcast.
        s_j = s_j_ref[...] + lamda_r * (-s_j_ref[...] + inv_tao_d * spike_j_ref[...])
        r_j = r_j_ref[...] - lamda_d * r_j_ref[...] + dt * s_j
        i_ref[...] += jnp.dot(r_j.astype(mxu_dtype), wt_ref[...],
                              preferred_element_type=jnp.float32)

    return kernel


def syn_forward(iback, noise, spike, s, r, wt,
                dt_over_tau, sqrt_coeff, sig, mu, tao_d, tao_r, dt,
                ti=None, tj=None):
    """One timestep of Syn.forward. `wt` must come from prepare_weights()."""
    n = int(iback.shape[0])
    ti_def, tj_def = _pick_tiles(n)
    ti = ti_def if ti is None else ti
    tj = tj_def if tj is None else tj
    assert n % ti == 0 and n % tj == 0, "N must be a multiple of the tile sizes"
    assert ti == n or ti % 128 == 0, "i tile must be a multiple of 128 (or full N)"
    assert tj == n or tj % 128 == 0, "j tile must be a multiple of 128 (or full N)"

    lamda_d = dt / tao_d
    lamda_r = dt / tao_r

    row = lambda v: jnp.asarray(v, jnp.float32).reshape(1, n)
    iback2, noise2, spike2, s2, r2 = map(row, (iback, noise, spike, s, r))

    kernel = make_fused_step_kernel(dt_over_tau, sig / sqrt_coeff, mu,
                                    lamda_r, lamda_d, 1.0 / tao_d, dt, wt.dtype)

    vec = jax.ShapeDtypeStruct((1, n), jnp.float32)
    resident = ti * tj * wt.dtype.itemsize + 4 * (9 * ti + 3 * tj)
    fused = pl.pallas_call(
        kernel,
        out_shape=(vec, vec, vec, vec),
        grid_spec=pltpu.PrefetchScalarGridSpec(
            num_scalar_prefetch=0,
            grid=(n // ti, n // tj),
            in_specs=[
                pl.BlockSpec((1, ti), lambda i, j: (0, i)),    # Iback   (i-tile)
                pl.BlockSpec((1, ti), lambda i, j: (0, i)),    # noise   (i-tile)
                pl.BlockSpec((1, ti), lambda i, j: (0, i)),    # spike   (i-tile)
                pl.BlockSpec((1, ti), lambda i, j: (0, i)),    # s       (i-tile)
                pl.BlockSpec((1, ti), lambda i, j: (0, i)),    # r       (i-tile)
                pl.BlockSpec((1, tj), lambda i, j: (0, j)),    # spike   (j-tile)
                pl.BlockSpec((1, tj), lambda i, j: (0, j)),    # s       (j-tile)
                pl.BlockSpec((1, tj), lambda i, j: (0, j)),    # r       (j-tile)
                pl.BlockSpec((tj, ti), lambda i, j: (j, i)),   # Wt block (bf16)
            ],
            out_specs=[
                pl.BlockSpec((1, ti), lambda i, j: (0, i)),    # I      (resident across j)
                pl.BlockSpec((1, ti), lambda i, j: (0, i)),    # Iback'
                pl.BlockSpec((1, ti), lambda i, j: (0, i)),    # s'
                pl.BlockSpec((1, ti), lambda i, j: (0, i)),    # r'
            ],
        ),
        compiler_params=pltpu.CompilerParams(
            dimension_semantics=("parallel", "arbitrary"),
            vmem_limit_bytes=_vmem_limit_bytes(resident)),
    )
    I, iback_new, s_new, r_new = fused(iback2, noise2, spike2, s2, r2,
                                       spike2, s2, r2, wt)
    return I.reshape(n), iback_new.reshape(n), s_new.reshape(n), r_new.reshape(n)


# ----------------------------------------------------------------------------
# Multi-timestep kernel: Wt DMA'd into VMEM once, state carried in resident blocks
# ----------------------------------------------------------------------------
def make_sim_kernel(dt_over_tau, ieff_scale, mu, lamda_r, lamda_d, inv_tao_d, dt, mxu_dtype):
    dt_over_tau = float(dt_over_tau)
    ieff_scale = float(ieff_scale)
    mu = float(mu)
    lamda_r = float(lamda_r)
    lamda_d = float(lamda_d)
    inv_tao_d = float(inv_tao_d)
    dt = float(dt)

    def kernel(noise_ref, spike_ref, iback0_ref, s0_ref, r0_ref, wt_ref,
               i_ref, iback_ref, s_ref, r_ref):
        t = pl.program_id(0)

        # state lives in the resident (constant-index) output blocks
        @pl.when(t == 0)
        def _():
            iback_ref[...] = iback0_ref[...]
            s_ref[...] = s0_ref[...]
            r_ref[...] = r0_ref[...]

        iback_new = iback_ref[...] + dt_over_tau * (noise_ref[...] - iback_ref[...])
        s_new = s_ref[...] + lamda_r * (-s_ref[...] + inv_tao_d * spike_ref[...])
        r_new = r_ref[...] - lamda_d * r_ref[...] + dt * s_new
        iback_ref[...] = iback_new
        s_ref[...] = s_new
        r_ref[...] = r_new

        i_ref[...] = (iback_new * ieff_scale + mu) + jnp.dot(
            r_new.astype(mxu_dtype), wt_ref[...], preferred_element_type=jnp.float32)

    return kernel


def syn_simulate(iback, noise_tn, spike_tn, s, r, wt,
                 dt_over_tau, sqrt_coeff, sig, mu, tao_d, tao_r, dt):
    """Run T timesteps in one pallas_call; Wt stays VMEM-resident across steps."""
    n = int(iback.shape[0])
    t_steps = int(noise_tn.shape[0])
    wt_bytes = n * n * wt.dtype.itemsize
    assert 2 * wt_bytes + (8 << 20) <= (48 << 20), (
        "N too large for the whole-Wt VMEM-resident multi-step kernel; "
        "call syn_forward per step instead")
    # TODO(synk): for larger N, tile Wt manually (pl.ANY + make_async_copy) and keep the
    # tiles resident across timesteps instead of a single whole-array block.

    lamda_d = dt / tao_d
    lamda_r = dt / tao_r

    row = lambda v: jnp.asarray(v, jnp.float32).reshape(1, n)
    iback2, s2, r2 = map(row, (iback, s, r))
    noise2 = jnp.asarray(noise_tn, jnp.float32).reshape(t_steps, n)
    spike2 = jnp.asarray(spike_tn, jnp.float32).reshape(t_steps, n)

    kernel = make_sim_kernel(dt_over_tau, sig / sqrt_coeff, mu, lamda_r, lamda_d,
                             1.0 / tao_d, dt, wt.dtype)

    vec = jax.ShapeDtypeStruct((1, n), jnp.float32)
    trace = jax.ShapeDtypeStruct((t_steps, n), jnp.float32)
    sim = pl.pallas_call(
        kernel,
        out_shape=(trace, vec, vec, vec),
        grid_spec=pltpu.PrefetchScalarGridSpec(
            num_scalar_prefetch=0,
            grid=(t_steps,),
            in_specs=[
                pl.BlockSpec((1, n), lambda t: (t, 0)),   # noise[t]  (streamed per step)
                pl.BlockSpec((1, n), lambda t: (t, 0)),   # spike[t]  (streamed per step)
                pl.BlockSpec((1, n), lambda t: (0, 0)),   # Iback0    (loaded once)
                pl.BlockSpec((1, n), lambda t: (0, 0)),   # s0
                pl.BlockSpec((1, n), lambda t: (0, 0)),   # r0
                pl.BlockSpec((n, n), lambda t: (0, 0)),   # Wt        (VMEM-resident)
            ],
            out_specs=[
                pl.BlockSpec((1, n), lambda t: (t, 0)),   # I[t]
                pl.BlockSpec((1, n), lambda t: (0, 0)),   # final Iback (state carry)
                pl.BlockSpec((1, n), lambda t: (0, 0)),   # final s
                pl.BlockSpec((1, n), lambda t: (0, 0)),   # final r
            ],
        ),
        compiler_params=pltpu.CompilerParams(
            dimension_semantics=("arbitrary",),
            vmem_limit_bytes=_vmem_limit_bytes(wt_bytes + 4 * 12 * n)),
    )
    I_trace, iback_f, s_f, r_f = sim(noise2, spike2, iback2, s2, r2, wt)
    return I_trace, iback_f.reshape(n), s_f.reshape(n), r_f.reshape(n)


# ----------------------------------------------------------------------------
# Pure-numpy references
# ----------------------------------------------------------------------------
def ref_forward(iback, noise, spike, s, r, w,
                dt_over_tau, sqrt_coeff, sig, mu, tao_d, tao_r, dt):
    lamda_d = dt / tao_d
    lamda_r = dt / tao_r
    iback_new = iback + dt_over_tau * (noise - iback)
    ieff = iback_new / sqrt_coeff * sig + mu
    s_new = s + lamda_r * (-s + spike / tao_d)
    r_new = r - lamda_d * r + dt * s_new
    I = w @ r_new + ieff
    return I, iback_new, s_new, r_new


def ref_simulate(iback, noise_tn, spike_tn, s, r, w, *hp):
    trace = []
    for t in range(noise_tn.shape[0]):
        I, iback, s, r = ref_forward(iback, noise_tn[t], spike_tn[t], s, r, w, *hp)
        trace.append(I)
    return np.stack(trace), iback, s, r


if __name__ == "__main__":
    # --- deterministic synthetic "brain" construction -----------------------
    neuron_num = [96, 80, 80]          # total N = 256 neurons (small demo)
    N = int(sum(neuron_num))
    regions = brain_region(neuron_num)

    np_rng = np.random.RandomState(0)
    syn_1 = syn_within_region(np_rng, 10, regions)
    weight_matrix = np.array([[0, 20, 5],
                              [15, 0, 30],
                              [12, 25, 0]], dtype=np.int32)
    syn_2 = syn_cross_region(np_rng, weight_matrix, regions)
    syn = np.concatenate([syn_1, syn_2], axis=0)
    weight = -np.ones(len(syn), dtype=np.float32)
    W = build_dense_w(syn, weight, N)   # densified sparse COO (duplicates summed)

    # --- hyperparameters / neuron attributes (scalars) ----------------------
    tao_d, tao_r, dt = 10.0, 2.0, 0.1
    dt_over_tau, sqrt_coeff, sig, mu = 0.05, 2.0, 1.5, 0.3
    hp = (dt_over_tau, sqrt_coeff, sig, mu, tao_d, tao_r, dt)

    # --- deterministic per-neuron state -------------------------------------
    key = jax.random.PRNGKey(0)
    k1, k2, k3, k4, k5, k6, k7 = jax.random.split(key, 7)
    iback = jax.random.normal(k1, (N,), jnp.float32)
    spike = (jax.random.uniform(k2, (N,)) < 0.2).astype(jnp.float32)
    s0 = 0.1 * jax.random.normal(k3, (N,), jnp.float32)
    r0 = 0.1 * jax.random.normal(k4, (N,), jnp.float32)
    # torch.randn(...) inside forward -> generated deterministically here and passed in
    noise = jax.random.normal(k5, (N,), jnp.float32)

    # Wt: transposed + narrowed to bf16 ONCE, reused across timesteps.
    wt = prepare_weights(W)

    # --- single-timestep fused kernel (module forward semantics) ------------
    I_ref, ib_exp, s_exp, r_exp = ref_forward(
        np.asarray(iback), np.asarray(noise), np.asarray(spike),
        np.asarray(s0), np.asarray(r0), W, *hp)

    out_a = syn_forward(iback, noise, spike, s0, r0, wt, *hp)               # auto tiles (2 i-tiles)
    out_b = syn_forward(iback, noise, spike, s0, r0, wt, *hp, ti=128, tj=128)  # j-reduction path
    jax.block_until_ready(out_a)
    jax.block_until_ready(out_b)

    for (I, ib_new, s_new, r_new) in (out_a, out_b):
        # I tolerance covers the bf16 r' operand on the MXU (f32 accumulation retained)
        np.testing.assert_allclose(np.asarray(I), I_ref, rtol=2e-3, atol=5e-3)
        np.testing.assert_allclose(np.asarray(ib_new), ib_exp, rtol=1e-5, atol=1e-5)
        np.testing.assert_allclose(np.asarray(s_new), s_exp, rtol=1e-5, atol=1e-5)
        np.testing.assert_allclose(np.asarray(r_new), r_exp, rtol=1e-5, atol=1e-5)

    # --- multi-timestep kernel: Wt stays VMEM-resident across steps ---------
    T = 8
    noise_tn = jax.random.normal(k6, (T, N), jnp.float32)
    spike_tn = (jax.random.uniform(k7, (T, N)) < 0.2).astype(jnp.float32)

    Iref_trace, ib_T, s_T, r_T = ref_simulate(
        np.asarray(iback), np.asarray(noise_tn), np.asarray(spike_tn),
        np.asarray(s0), np.asarray(r0), W, *hp)

    I_trace, ib_f, s_f, r_f = syn_simulate(iback, noise_tn, spike_tn, s0, r0, wt, *hp)
    jax.block_until_ready((I_trace, ib_f, s_f, r_f))

    np.testing.assert_allclose(np.asarray(I_trace), Iref_trace, rtol=2e-3, atol=5e-3)
    np.testing.assert_allclose(np.asarray(ib_f), ib_T, rtol=1e-4, atol=1e-5)
    np.testing.assert_allclose(np.asarray(s_f), s_T, rtol=1e-4, atol=1e-5)
    np.testing.assert_allclose(np.asarray(r_f), r_T, rtol=1e-4, atol=1e-5)

    print("KERNEL_OK")
</pallas_src>

<mosaic_0001>
module attributes {stable_mosaic.version = 11 : i64} {
  func.func @kernel(%arg0: i32, %arg1: i32, %arg2: memref<1x128xf32, #tpu.memory_space<vmem>>, %arg3: memref<1x128xf32, #tpu.memory_space<vmem>>, %arg4: memref<1x128xf32, #tpu.memory_space<vmem>>, %arg5: memref<1x128xf32, #tpu.memory_space<vmem>>, %arg6: memref<1x128xf32, #tpu.memory_space<vmem>>, %arg7: memref<1x256xf32, #tpu.memory_space<vmem>>, %arg8: memref<1x256xf32, #tpu.memory_space<vmem>>, %arg9: memref<1x256xf32, #tpu.memory_space<vmem>>, %arg10: memref<256x128xbf16, #tpu.memory_space<vmem>>, %arg11: memref<1x128xf32, #tpu.memory_space<vmem>>, %arg12: memref<1x128xf32, #tpu.memory_space<vmem>>, %arg13: memref<1x128xf32, #tpu.memory_space<vmem>>, %arg14: memref<1x128xf32, #tpu.memory_space<vmem>>) attributes {dimension_semantics = [#tpu.dimension_semantics<parallel>, #tpu.dimension_semantics<arbitrary>], iteration_bounds = array<i64: 2, 1>, scalar_prefetch = 0 : i64, scratch_operands = 0 : i64, tpu.core_type = #tpu.core_type<tc>, window_params = [{transform_indices = @transform_0, window_bounds = array<i64: 1, 128>}, {transform_indices = @transform_1, window_bounds = array<i64: 1, 128>}, {transform_indices = @transform_2, window_bounds = array<i64: 1, 128>}, {transform_indices = @transform_3, window_bounds = array<i64: 1, 128>}, {transform_indices = @transform_4, window_bounds = array<i64: 1, 128>}, {transform_indices = @transform_5, window_bounds = array<i64: 1, 256>}, {transform_indices = @transform_6, window_bounds = array<i64: 1, 256>}, {transform_indices = @transform_7, window_bounds = array<i64: 1, 256>}, {transform_indices = @transform_8, window_bounds = array<i64: 256, 128>}, {transform_indices = @transform_9, window_bounds = array<i64: 1, 128>}, {transform_indices = @transform_10, window_bounds = array<i64: 1, 128>}, {transform_indices = @transform_11, window_bounds = array<i64: 1, 128>}, {transform_indices = @transform_12, window_bounds = array<i64: 1, 128>}]} {
    %c0_i32 = arith.constant 0 : i32
    %0 = arith.cmpi eq, %arg1, %c0_i32 : i32
    %1 = arith.extui %0 : i1 to i32
    %c0_i32_0 = arith.constant 0 : i32
    %2 = arith.cmpi ne, %1, %c0_i32_0 : i32
    scf.if %2 {
      %c0_21 = arith.constant 0 : index
      %c0_22 = arith.constant 0 : index
      %28 = vector.load %arg2[%c0_21, %c0_22] : memref<1x128xf32, #tpu.memory_space<vmem>>, vector<1x128xf32>
      %c0_23 = arith.constant 0 : index
      %c0_24 = arith.constant 0 : index
      %29 = vector.load %arg3[%c0_23, %c0_24] : memref<1x128xf32, #tpu.memory_space<vmem>>, vector<1x128xf32>
      %c0_25 = arith.constant 0 : index
      %c0_26 = arith.constant 0 : index
      %30 = vector.load %arg2[%c0_25, %c0_26] : memref<1x128xf32, #tpu.memory_space<vmem>>, vector<1x128xf32>
      %31 = arith.subf %29, %30 : vector<1x128xf32>
      %cst_27 = arith.constant 5.000000e-02 : f32
      %32 = vector.broadcast %cst_27 : f32 to vector<1x128xf32>
      %33 = arith.mulf %32, %31 : vector<1x128xf32>
      %34 = arith.addf %28, %33 : vector<1x128xf32>
      %c0_28 = arith.constant 0 : index
      %c0_29 = arith.constant 0 : index
      %35 = vector.load %arg12[%c0_28, %c0_29] : memref<1x128xf32, #tpu.memory_space<vmem>>, vector<1x128xf32>
      tpu.vector_store %arg12[%c0_28, %c0_29], %34 {strides = array<i32>} : memref<1x128xf32, #tpu.memory_space<vmem>>, vector<1x128xf32>,
      %cst_30 = arith.constant 7.500000e-01 : f32
      %36 = vector.broadcast %cst_30 : f32 to vector<1x128xf32>
      %37 = arith.mulf %34, %36 : vector<1x128xf32>
      %cst_31 = arith.constant 3.000000e-01 : f32
      %38 = vector.broadcast %cst_31 : f32 to vector<1x128xf32>
      %39 = arith.addf %37, %38 : vector<1x128xf32>
      %c0_32 = arith.constant 0 : index
      %c0_33 = arith.constant 0 : index
      %40 = vector.load %arg11[%c0_32, %c0_33] : memref<1x128xf32, #tpu.memory_space<vmem>>, vector<1x128xf32>
      tpu.vector_store %arg11[%c0_32, %c0_33], %39 {strides = array<i32>} : memref<1x128xf32, #tpu.memory_space<vmem>>, vector<1x128xf32>,
      %c0_34 = arith.constant 0 : index
      %c0_35 = arith.constant 0 : index
      %41 = vector.load %arg5[%c0_34, %c0_35] : memref<1x128xf32, #tpu.memory_space<vmem>>, vector<1x128xf32>
      %c0_36 = arith.constant 0 : index
      %c0_37 = arith.constant 0 : index
      %42 = vector.load %arg5[%c0_36, %c0_37] : memref<1x128xf32, #tpu.memory_space<vmem>>, vector<1x128xf32>
      %cst_38 = arith.constant 0.000000e+00 : f32
      %43 = vector.broadcast %cst_38 : f32 to vector<1x128xf32>
      %44 = arith.subf %43, %42 : vector<1x128xf32>
      %c0_39 = arith.constant 0 : index
      %c0_40 = arith.constant 0 : index
      %45 = vector.load %arg4[%c0_39, %c0_40] : memref<1x128xf32, #tpu.memory_space<vmem>>, vector<1x128xf32>
      %cst_41 = arith.constant 1.000000e-01 : f32
      %46 = vector.broadcast %cst_41 : f32 to vector<1x128xf32>
      %47 = arith.mulf %46, %45 : vector<1x128xf32>
      %48 = arith.addf %44, %47 : vector<1x128xf32>
      %cst_42 = arith.constant 5.000000e-02 : f32
      %49 = vector.broadcast %cst_42 : f32 to vector<1x128xf32>
      %50 = arith.mulf %49, %48 : vector<1x128xf32>
      %51 = arith.addf %41, %50 : vector<1x128xf32>
      %c0_43 = arith.constant 0 : index
      %c0_44 = arith.constant 0 : index
      %52 = vector.load %arg13[%c0_43, %c0_44] : memref<1x128xf32, #tpu.memory_space<vmem>>, vector<1x128xf32>
      tpu.vector_store %arg13[%c0_43, %c0_44], %51 {strides = array<i32>} : memref<1x128xf32, #tpu.memory_space<vmem>>, vector<1x128xf32>,
      %c0_45 = arith.constant 0 : index
      %c0_46 = arith.constant 0 : index
      %53 = vector.load %arg6[%c0_45, %c0_46] : memref<1x128xf32, #tpu.memory_space<vmem>>, vector<1x128xf32>
      %c0_47 = arith.constant 0 : index
      %c0_48 = arith.constant 0 : index
      %54 = vector.load %arg6[%c0_47, %c0_48] : memref<1x128xf32, #tpu.memory_space<vmem>>, vector<1x128xf32>
      %cst_49 = arith.constant 0.00999999977 : f32
      %55 = vector.broadcast %cst_49 : f32 to vector<1x128xf32>
      %56 = arith.mulf %55, %54 : vector<1x128xf32>
      %57 = arith.subf %53, %56 : vector<1x128xf32>
      %cst_50 = arith.constant 1.000000e-01 : f32
      %58 = vector.broadcast %cst_50 : f32 to vector<1x128xf32>
      %59 = arith.mulf %58, %51 : vector<1x128xf32>
      %60 = arith.addf %57, %59 : vector<1x128xf32>
      %c0_51 = arith.constant 0 : index
      %c0_52 = arith.constant 0 : index
      %61 = vector.load %arg14[%c0_51, %c0_52] : memref<1x128xf32, #tpu.memory_space<vmem>>, vector<1x128xf32>
      tpu.vector_store %arg14[%c0_51, %c0_52], %60 {strides = array<i32>} : memref<1x128xf32, #tpu.memory_space<vmem>>, vector<1x128xf32>,
    } else {
    }
    %c0 = arith.constant 0 : index
    %c0_1 = arith.constant 0 : index
    %3 = vector.load %arg8[%c0, %c0_1] : memref<1x256xf32, #tpu.memory_space<vmem>>, vector<1x256xf32>
    %c0_2 = arith.constant 0 : index
    %c0_3 = arith.constant 0 : index
    %4 = vector.load %arg8[%c0_2, %c0_3] : memref<1x256xf32, #tpu.memory_space<vmem>>, vector<1x256xf32>
    %cst = arith.constant 0.000000e+00 : f32
    %5 = vector.broadcast %cst : f32 to vector<1x256xf32>
    %6 = arith.subf %5, %4 : vector<1x256xf32>
    %c0_4 = arith.constant 0 : index
    %c0_5 = arith.constant 0 : index
    %7 = vector.load %arg7[%c0_4, %c0_5] : memref<1x256xf32, #tpu.memory_space<vmem>>, vector<1x256xf32>
    %cst_6 = arith.constant 1.000000e-01 : f32
    %8 = vector.broadcast %cst_6 : f32 to vector<1x256xf32>
    %9 = arith.mulf %8, %7 : vector<1x256xf32>
    %10 = arith.addf %6, %9 : vector<1x256xf32>
    %cst_7 = arith.constant 5.000000e-02 : f32
    %11 = vector.broadcast %cst_7 : f32 to vector<1x256xf32>
    %12 = arith.mulf %11, %10 : vector<1x256xf32>
    %13 = arith.addf %3, %12 : vector<1x256xf32>
    %c0_8 = arith.constant 0 : index
    %c0_9 = arith.constant 0 : index
    %14 = vector.load %arg9[%c0_8, %c0_9] : memref<1x256xf32, #tpu.memory_space<vmem>>, vector<1x256xf32>
    %c0_10 = arith.constant 0 : index
    %c0_11 = arith.constant 0 : index
    %15 = vector.load %arg9[%c0_10, %c0_11] : memref<1x256xf32, #tpu.memory_space<vmem>>, vector<1x256xf32>
    %cst_12 = arith.constant 0.00999999977 : f32
    %16 = vector.broadcast %cst_12 : f32 to vector<1x256xf32>
    %17 = arith.mulf %16, %15 : vector<1x256xf32>
    %18 = arith.subf %14, %17 : vector<1x256xf32>
    %cst_13 = arith.constant 1.000000e-01 : f32
    %19 = vector.broadcast %cst_13 : f32 to vector<1x256xf32>
    %20 = arith.mulf %19, %13 : vector<1x256xf32>
    %21 = arith.addf %18, %20 : vector<1x256xf32>
    %c0_14 = arith.constant 0 : index
    %c0_15 = arith.constant 0 : index
    %22 = vector.load %arg11[%c0_14, %c0_15] : memref<1x128xf32, #tpu.memory_space<vmem>>, vector<1x128xf32>
    %23 = arith.truncf %21 : vector<1x256xf32> to vector<1x256xbf16>
    %c0_16 = arith.constant 0 : index
    %c0_17 = arith.constant 0 : index
    %24 = vector.load %arg10[%c0_16, %c0_17] : memref<256x128xbf16, #tpu.memory_space<vmem>>, vector<256x128xbf16>
    %cst_18 = arith.constant dense<0.000000e+00> : vector<1x128xf32>
    %25 = tpu.matmul %23, %24, %cst_18 {dimension_numbers = #tpu.dot_dimension_numbers<[1], [0], [0], [1], [0, 0, 1, 1], [], []>} : vector<1x256xbf16>, vector<256x128xbf16>, vector<1x128xf32> -> vector<1x128xf32>
    %26 = arith.addf %22, %25 : vector<1x128xf32>
    %c0_19 = arith.constant 0 : index
    %c0_20 = arith.constant 0 : index
    %27 = vector.load %arg11[%c0_19, %c0_20] : memref<1x128xf32, #tpu.memory_space<vmem>>, vector<1x128xf32>
    tpu.vector_store %arg11[%c0_19, %c0_20], %26 {strides = array<i32>} : memref<1x128xf32, #tpu.memory_space<vmem>>, vector<1x128xf32>,
    return
  }
  func.func @transform_0(%arg0: i32, %arg1: i32) -> (i32, i32) {
    %c0_i32 = arith.constant 0 : i32
    %c0_i32_0 = arith.constant 0 : i32
    return %c0_i32, %arg0 : i32, i32
  }
  func.func @transform_1(%arg0: i32, %arg1: i32) -> (i32, i32) {
    %c0_i32 = arith.constant 0 : i32
    %c0_i32_0 = arith.constant 0 : i32
    return %c0_i32, %arg0 : i32, i32
  }
  func.func @transform_2(%arg0: i32, %arg1: i32) -> (i32, i32) {
    %c0_i32 = arith.constant 0 : i32
    %c0_i32_0 = arith.constant 0 : i32
    return %c0_i32, %arg0 : i32, i32
  }
  func.func @transform_3(%arg0: i32, %arg1: i32) -> (i32, i32) {
    %c0_i32 = arith.constant 0 : i32
    %c0_i32_0 = arith.constant 0 : i32
    return %c0_i32, %arg0 : i32, i32
  }
  func.func @transform_4(%arg0: i32, %arg1: i32) -> (i32, i32) {
    %c0_i32 = arith.constant 0 : i32
    %c0_i32_0 = arith.constant 0 : i32
    return %c0_i32, %arg0 : i32, i32
  }
  func.func @transform_5(%arg0: i32, %arg1: i32) -> (i32, i32) {
    %c0_i32 = arith.constant 0 : i32
    %c0_i32_0 = arith.constant 0 : i32
    return %c0_i32, %arg1 : i32, i32
  }
  func.func @transform_6(%arg0: i32, %arg1: i32) -> (i32, i32) {
    %c0_i32 = arith.constant 0 : i32
    %c0_i32_0 = arith.constant 0 : i32
    return %c0_i32, %arg1 : i32, i32
  }
  func.func @transform_7(%arg0: i32, %arg1: i32) -> (i32, i32) {
    %c0_i32 = arith.constant 0 : i32
    %c0_i32_0 = arith.constant 0 : i32
    return %c0_i32, %arg1 : i32, i32
  }
  func.func @transform_8(%arg0: i32, %arg1: i32) -> (i32, i32) {
    %c0_i32 = arith.constant 0 : i32
    return %arg1, %arg0 : i32, i32
  }
  func.func @transform_9(%arg0: i32, %arg1: i32) -> (i32, i32) {
    %c0_i32 = arith.constant 0 : i32
    %c0_i32_0 = arith.constant 0 : i32
    return %c0_i32, %arg0 : i32, i32
  }
  func.func @transform_10(%arg0: i32, %arg1: i32) -> (i32, i32) {
    %c0_i32 = arith.constant 0 : i32
    %c0_i32_0 = arith.constant 0 : i32
    return %c0_i32, %arg0 : i32, i32
  }
  func.func @transform_11(%arg0: i32, %arg1: i32) -> (i32, i32) {
    %c0_i32 = arith.constant 0 : i32
    %c0_i32_0 = arith.constant 0 : i32
    return %c0_i32, %arg0 : i32, i32
  }
  func.func @transform_12(%arg0: i32, %arg1: i32) -> (i32, i32) {
    %c0_i32 = arith.constant 0 : i32
    %c0_i32_0 = arith.constant 0 : i32
    return %c0_i32, %arg0 : i32, i32
  }
}

</mosaic_0001>

<llo_original>
// kernel: tpu_custom_call.1
$region0: #{tpu_custom_call.1}
  #allocation0 [shape = 'u32[]', space=smem, size = 0x4, offset = 0x4, fixed_abs, tag = 'smem constant byte address 0x4 - core index']
  #allocation1 [shape = 'u32[72,128]{1,0:T(1,128)}', space=vmem, size = 0x9000, scoped, tag = 'internal scratch']
  %s0 = inlined_call_operand.hbm [shape: f32[1,256], index: 0, kind: input, shape index: {}]
  %s1 = inlined_call_operand.hbm [shape: f32[1,256], index: 1, kind: input, shape index: {}]
  %s2 = inlined_call_operand.hbm [shape: f32[1,256], index: 2, kind: input, shape index: {}]
  %s3 = inlined_call_operand.vmem [shape: f32[1,256], index: 3, kind: input, shape index: {}]
  %s4 = inlined_call_operand.hbm [shape: f32[1,256], index: 4, kind: input, shape index: {}]
  %s5 = inlined_call_operand.vmem [shape: f32[1,256], index: 5, kind: input, shape index: {}]
  %s6 = inlined_call_operand.hbm [shape: f32[1,256], index: 6, kind: input, shape index: {}]
  %s7 = inlined_call_operand.vmem [shape: f32[1,256], index: 7, kind: input, shape index: {}]
  %s8 = inlined_call_operand.hbm [shape: bf16[256,256], index: 8, kind: input, shape index: {}]
  %s9 = inlined_call_operand.hbm [shape: f32[1,256], index: 9, kind: output, shape index: {0}]
  %s10 = inlined_call_operand.hbm [shape: f32[1,256], index: 10, kind: output, shape index: {1}]
  %s11 = inlined_call_operand.hbm [shape: f32[1,256], index: 11, kind: output, shape index: {2}]
  %s12 = inlined_call_operand.hbm [shape: f32[1,256], index: 12, kind: output, shape index: {3}]
  %13 = xla_tuple %s9, %s10, %s11, %s12
  %s14 = sld [smem:[#allocation0]]
  $region121: #{tpu_custom_call.1} parent=0
    _
  %s16 = ssub.s32 1, %s14
  %s17 = scalar_select 0, %s16, %s14
  $region1: #{tpu_custom_call.1} parent=0
    #allocation2 [shape = 'u8[1024]{0}', space=vmem, size = 0x400, scoped, tag = 'input window, operand 0']
    #allocation3 [shape = 's32[2]{0}', space=sflag, size = 0x8, scoped, tag = 'scoped memory for tpu_custom_call.1']
    #allocation4 [shape = 's32[2]{0}', space=sflag, size = 0x8, scoped, tag = 'scoped memory for tpu_custom_call.1']
    #allocation5 [shape = 'u8[1024]{0}', space=vmem, size = 0x400, scoped, tag = 'input window, operand 1']
    #allocation6 [shape = 's32[2]{0}', space=sflag, size = 0x8, scoped, tag = 'scoped memory for tpu_custom_call.1']
    #allocation7 [shape = 'u8[1024]{0}', space=vmem, size = 0x400, scoped, tag = 'input window, operand 2']
    #allocation8 [shape = 'u8[1024]{0}', space=vmem, size = 0x400, scoped, tag = 'input window, operand 4']
    #allocation9 [shape = 's32[2]{0}', space=sflag, size = 0x8, scoped, tag = 'scoped memory for tpu_custom_call.1']
    #allocation10 [shape = 'u8[1024]{0}', space=vmem, size = 0x400, scoped, tag = 'input window, operand 6, single buffered']
    #allocation11 [shape = 'u8[131072]{0}', space=vmem, size = 0x20000, scoped, tag = 'input window, operand 8']
    #allocation12 [shape = 's32[2]{0}', space=sflag, size = 0x8, scoped, tag = 'scoped memory for tpu_custom_call.1']
    #allocation13 [shape = 'u8[1024]{0}', space=vmem, size = 0x400, scoped, tag = 'output window, operand 0']
    #allocation14 [shape = 'u8[1024]{0}', space=vmem, size = 0x400, scoped, tag = 'output window, operand 1']
    #allocation15 [shape = 's32[2]{0}', space=sflag, size = 0x8, scoped, tag = 'scoped memory for tpu_custom_call.1']
    #allocation16 [shape = 'u8[1024]{0}', space=vmem, size = 0x400, scoped, tag = 'output window, operand 2']
    #allocation17 [shape = 'u8[1024]{0}', space=vmem, size = 0x400, scoped, tag = 'output window, operand 3']
    #allocation18 [shape = 's32[2]{0}', space=sflag, size = 0x8, scoped, tag = 'scoped memory for tpu_custom_call.1']
    %18 = vsyncpa [#allocation3], 0
    %s19 = scalar_lea.sflag [#allocation3], 1
    %20 = vsyncpa %s19, 0
    %21 = vsyncpa [#allocation6], 0
    %s22 = scalar_lea.sflag [#allocation6], 1
    %23 = vsyncpa %s22, 0
    %24 = vsyncpa [#allocation9], 0
    %s25 = scalar_lea.sflag [#allocation9], 1
    %26 = vsyncpa %s25, 0
    %27 = vsyncpa [#allocation12], 0
    %s28 = scalar_lea.sflag [#allocation12], 1
    %29 = vsyncpa %s28, 0
    %30 = vsyncpa [#allocation4], 0
    %s31 = scalar_lea.sflag [#allocation4], 1
    %32 = vsyncpa %s31, 0
    %33 = vsyncpa [#allocation15], 0
    %s34 = scalar_lea.sflag [#allocation15], 1
    %35 = vsyncpa %s34, 0
    %36 = vsyncpa [#allocation18], 0
    %s37 = scalar_lea.sflag [#allocation18], 1
    %38 = vsyncpa %s37, 0
    loop: start=0, step=1, limit=4
    $region2: #{tpu_custom_call.1} parent=1 // loop_pre_header
      _
    $region3: #{tpu_custom_call.1} parent=1 // loop_header
      %s40 = sphi 0, %s44
      %p41 = scmp.ge.s32.totalorder %s40, 4
      %s47 = sphi 0, %s59
      %s48 = sphi 0, %s55
      %s49 = sphi 0, %s47
      %s50 = sphi 0, %s48
      %s51 = sphi 0, %s49
      %s52 = sphi 0, %s50
      %s62 = sphi 0, %s64
      %s65 = sphi 0, %s62
      %s66 = sphi 0, %s65
      %s82 = sphi 0, %s66
      %s88 = sphi 0, %s90
      %s91 = sphi 0, %s88
      %s92 = sphi 0, %s91
      %s108 = sphi 0, %s92
      %s114 = sphi 0, %s116
      %s117 = sphi 0, %s114
      %s118 = sphi 0, %s117
      %s134 = sphi 0, %s118
      %s140 = sphi 0, %s142
      %s143 = sphi 0, %s140
      %s144 = sphi 0, %s143
      %s160 = sphi 0, %s144
      %s166 = sphi 0, %s168
      %s169 = sphi 0, %s166
      %s170 = sphi 0, %s169
      %s186 = sphi 0, %s170
      %s192 = sphi 0, %s194
      %s195 = sphi 0, %s192
      %s196 = sphi 0, %s195
      %s212 = sphi 0, %s196
      %s218 = sphi 0, %s220
      %s221 = sphi 0, %s218
      %s222 = sphi 0, %s221
      %s238 = sphi 0, %s222
      %s244 = sphi 0, %s246
      %s247 = sphi 0, %s244
      %s248 = sphi 0, %s247
      %s264 = sphi 0, %s248
      %s272 = sphi 0, %s274
      %s275 = sphi 0, %s272
      %s276 = sphi 0, %s275
      %s292 = sphi 0, %s276
      %s298 = sphi 0, %s300
      %s301 = sphi 0, %s298
      %s302 = sphi 0, %s301
      %s318 = sphi 0, %s302
      %s324 = sphi 0, %s326
      %s327 = sphi 0, %s324
      %s328 = sphi 0, %s327
      %s344 = sphi 0, %s328
      %s350 = sphi 0, %s352
      %s353 = sphi 0, %s350
      %s354 = sphi 0, %s353
      %s370 = sphi 0, %s354
      %s376 = sphi 0, %s378
      %s379 = sphi 0, %s376
      %s380 = sphi 0, %s379
      %s396 = sphi 0, %s380
    $region4: #{tpu_custom_call.1} parent=1 // loop_header_branch
      %43 = sbr.rel (%p41) target = $region8
    $region5: #{tpu_custom_call.1} parent=1 // loop_body
      %s45 = ssub.s32 %s40, 1
      %s46 = ssub.s32 %s40, 2
      %s53 = sadd.s32 1, %s48
      %p54 = scmp.ge.s32.totalorder %s53, 1
      %s55 = scalar_select %p54, 0, %s53
      %s56 = sadd.s32 1, %s47
      %s57 = scalar_select %p54, %s56, %s47
      %p58 = scmp.ge.s32.totalorder %s57, 2
      %s59 = scalar_select %p58, 0, %s57
      %s60 = ssub.s32 %s47, %s59
      %p61 = scmp.eq.s32.totalorder %s60, 0
      %s63 = sadd.s32 %s62, 1
      %s64 = scalar_select %p61, %s62, %s63
      %p67 = pneg %p61
      %p68 = scmp.eq.s32.totalorder %s40, 1
      %p69 = por %p67, %p68
      %p70 = scmp.ne.s32.totalorder %s62, %s65
      %p71 = scmp.eq.s32.totalorder %s40, 0
      %p72 = por %p70, %p71
      %p73 = scmp.ne.s32.totalorder %s62, %s65
      %p74 = scmp.eq.s32.totalorder %s45, 1
      %p75 = por %p73, %p74
      %p76 = scmp.ne.s32.totalorder %s65, %s66
      %p77 = scmp.eq.s32.totalorder %s45, 0
      %p78 = por %p76, %p77
      %p79 = scmp.ne.s32.totalorder %s65, %s66
      %p80 = scmp.eq.s32.totalorder %s46, 1
      %p81 = por %p79, %p80
      %p83 = scmp.ne.s32.totalorder %s66, %s82
      %p84 = scmp.eq.s32.totalorder %s46, 0
      %p85 = por %p83, %p84
      %s86 = ssub.s32 %s47, %s59
      %p87 = scmp.eq.s32.totalorder %s86, 0
      %s89 = sadd.s32 %s88, 1
      %s90 = scalar_select %p87, %s88, %s89
      %p93 = pneg %p87
      %p94 = scmp.eq.s32.totalorder %s40, 1
      %p95 = por %p93, %p94
      %p96 = scmp.ne.s32.totalorder %s88, %s91
      %p97 = scmp.eq.s32.totalorder %s40, 0
      %p98 = por %p96, %p97
      %p99 = scmp.ne.s32.totalorder %s88, %s91
      %p100 = scmp.eq.s32.totalorder %s45, 1
      %p101 = por %p99, %p100
      %p102 = scmp.ne.s32.totalorder %s91, %s92
      %p103 = scmp.eq.s32.totalorder %s45, 0
      %p104 = por %p102, %p103
      %p105 = scmp.ne.s32.totalorder %s91, %s92
      %p106 = scmp.eq.s32.totalorder %s46, 1
      %p107 = por %p105, %p106
      %p109 = scmp.ne.s32.totalorder %s92, %s108
      %p110 = scmp.eq.s32.totalorder %s46, 0
      %p111 = por %p109, %p110
      %s112 = ssub.s32 %s47, %s59
      %p113 = scmp.eq.s32.totalorder %s112, 0
      %s115 = sadd.s32 %s114, 1
      %s116 = scalar_select %p113, %s114, %s115
      %p119 = pneg %p113
      %p120 = scmp.eq.s32.totalorder %s40, 1
      %p121 = por %p119, %p120
      %p122 = scmp.ne.s32.totalorder %s114, %s117
      %p123 = scmp.eq.s32.totalorder %s40, 0
      %p124 = por %p122, %p123
      %p125 = scmp.ne.s32.totalorder %s114, %s117
      %p126 = scmp.eq.s32.totalorder %s45, 1
      %p127 = por %p125, %p126
      %p128 = scmp.ne.s32.totalorder %s117, %s118
      %p129 = scmp.eq.s32.totalorder %s45, 0
      %p130 = por %p128, %p129
      %p131 = scmp.ne.s32.totalorder %s117, %s118
      %p132 = scmp.eq.s32.totalorder %s46, 1
      %p133 = por %p131, %p132
      %p135 = scmp.ne.s32.totalorder %s118, %s134
      %p136 = scmp.eq.s32.totalorder %s46, 0
      %p137 = por %p135, %p136
      %s138 = ssub.s32 %s47, %s59
      %p139 = scmp.eq.s32.totalorder %s138, 0
      %s141 = sadd.s32 %s140, 1
      %s142 = scalar_select %p139, %s140, %s141
      %p145 = pneg %p139
      %p146 = scmp.eq.s32.totalorder %s40, 1
      %p147 = por %p145, %p146
      %p148 = scmp.ne.s32.totalorder %s140, %s143
      %p149 = scmp.eq.s32.totalorder %s40, 0
      %p150 = por %p148, %p149
      %p151 = scmp.ne.s32.totalorder %s140, %s143
      %p152 = scmp.eq.s32.totalorder %s45, 1
      %p153 = por %p151, %p152
      %p154 = scmp.ne.s32.totalorder %s143, %s144
      %p155 = scmp.eq.s32.totalorder %s45, 0
      %p156 = por %p154, %p155
      %p157 = scmp.ne.s32.totalorder %s143, %s144
      %p158 = scmp.eq.s32.totalorder %s46, 1
      %p159 = por %p157, %p158
      %p161 = scmp.ne.s32.totalorder %s144, %s160
      %p162 = scmp.eq.s32.totalorder %s46, 0
      %p163 = por %p161, %p162
      %s164 = ssub.s32 %s47, %s59
      %p165 = scmp.eq.s32.totalorder %s164, 0
      %s167 = sadd.s32 %s166, 1
      %s168 = scalar_select %p165, %s166, %s167
      %p171 = pneg %p165
      %p172 = scmp.eq.s32.totalorder %s40, 1
      %p173 = por %p171, %p172
      %p174 = scmp.ne.s32.totalorder %s166, %s169
      %p175 = scmp.eq.s32.totalorder %s40, 0
      %p176 = por %p174, %p175
      %p177 = scmp.ne.s32.totalorder %s166, %s169
      %p178 = scmp.eq.s32.totalorder %s45, 1
      %p179 = por %p177, %p178
      %p180 = scmp.ne.s32.totalorder %s169, %s170
      %p181 = scmp.eq.s32.totalorder %s45, 0
      %p182 = por %p180, %p181
      %p183 = scmp.ne.s32.totalorder %s169, %s170
      %p184 = scmp.eq.s32.totalorder %s46, 1
      %p185 = por %p183, %p184
      %p187 = scmp.ne.s32.totalorder %s170, %s186
      %p188 = scmp.eq.s32.totalorder %s46, 0
      %p189 = por %p187, %p188
      %s190 = ssub.s32 %s48, %s55
      %p191 = scmp.eq.s32.totalorder %s190, 0
      %s193 = sadd.s32 %s192, 1
      %s194 = scalar_select %p191, %s192, %s193
      %p197 = pneg %p191
      %p198 = scmp.eq.s32.totalorder %s40, 1
      %p199 = por %p197, %p198
      %p200 = scmp.ne.s32.totalorder %s192, %s195
      %p201 = scmp.eq.s32.totalorder %s40, 0
      %p202 = por %p200, %p201
      %p203 = scmp.ne.s32.totalorder %s192, %s195
      %p204 = scmp.eq.s32.totalorder %s45, 1
      %p205 = por %p203, %p204
      %p206 = scmp.ne.s32.totalorder %s195, %s196
      %p207 = scmp.eq.s32.totalorder %s45, 0
      %p208 = por %p206, %p207
      %p209 = scmp.ne.s32.totalorder %s195, %s196
      %p210 = scmp.eq.s32.totalorder %s46, 1
      %p211 = por %p209, %p210
      %p213 = scmp.ne.s32.totalorder %s196, %s212
      %p214 = scmp.eq.s32.totalorder %s46, 0
      %p215 = por %p213, %p214
      %s216 = ssub.s32 %s48, %s55
      %p217 = scmp.eq.s32.totalorder %s216, 0
      %s219 = sadd.s32 %s218, 1
      %s220 = scalar_select %p217, %s218, %s219
      %p223 = pneg %p217
      %p224 = scmp.eq.s32.totalorder %s40, 1
      %p225 = por %p223, %p224
      %p226 = scmp.ne.s32.totalorder %s218, %s221
      %p227 = scmp.eq.s32.totalorder %s40, 0
      %p228 = por %p226, %p227
      %p229 = scmp.ne.s32.totalorder %s218, %s221
      %p230 = scmp.eq.s32.totalorder %s45, 1
      %p231 = por %p229, %p230
      %p232 = scmp.ne.s32.totalorder %s221, %s222
      %p233 = scmp.eq.s32.totalorder %s45, 0
      %p234 = por %p232, %p233
      %p235 = scmp.ne.s32.totalorder %s221, %s222
      %p236 = scmp.eq.s32.totalorder %s46, 1
      %p237 = por %p235, %p236
      %p239 = scmp.ne.s32.totalorder %s222, %s238
      %p240 = scmp.eq.s32.totalorder %s46, 0
      %p241 = por %p239, %p240
      %s242 = ssub.s32 %s48, %s55
      %p243 = scmp.eq.s32.totalorder %s242, 0
      %s245 = sadd.s32 %s244, 1
      %s246 = scalar_select %p243, %s244, %s245
      %p249 = pneg %p243
      %p250 = scmp.eq.s32.totalorder %s40, 1
      %p251 = por %p249, %p250
      %p252 = scmp.ne.s32.totalorder %s244, %s247
      %p253 = scmp.eq.s32.totalorder %s40, 0
      %p254 = por %p252, %p253
      %p255 = scmp.ne.s32.totalorder %s244, %s247
      %p256 = scmp.eq.s32.totalorder %s45, 1
      %p257 = por %p255, %p256
      %p258 = scmp.ne.s32.totalorder %s247, %s248
      %p259 = scmp.eq.s32.totalorder %s45, 0
      %p260 = por %p258, %p259
      %p261 = scmp.ne.s32.totalorder %s247, %s248
      %p262 = scmp.eq.s32.totalorder %s46, 1
      %p263 = por %p261, %p262
      %p265 = scmp.ne.s32.totalorder %s248, %s264
      %p266 = scmp.eq.s32.totalorder %s46, 0
      %p267 = por %p265, %p266
      %s268 = ssub.s32 %s48, %s55
      %s269 = ssub.s32 %s47, %s59
      %s270 = sor.u32 %s268, %s269
      %p271 = scmp.eq.s32.totalorder %s270, 0
      %s273 = sadd.s32 %s272, 1
      %s274 = scalar_select %p271, %s272, %s273
      %p277 = pneg %p271
      %p278 = scmp.eq.s32.totalorder %s40, 1
      %p279 = por %p277, %p278
      %p280 = scmp.ne.s32.totalorder %s272, %s275
      %p281 = scmp.eq.s32.totalorder %s40, 0
      %p282 = por %p280, %p281
      %p283 = scmp.ne.s32.totalorder %s272, %s275
      %p284 = scmp.eq.s32.totalorder %s45, 1
      %p285 = por %p283, %p284
      %p286 = scmp.ne.s32.totalorder %s275, %s276
      %p287 = scmp.eq.s32.totalorder %s45, 0
      %p288 = por %p286, %p287
      %p289 = scmp.ne.s32.totalorder %s275, %s276
      %p290 = scmp.eq.s32.totalorder %s46, 1
      %p291 = por %p289, %p290
      %p293 = scmp.ne.s32.totalorder %s276, %s292
      %p294 = scmp.eq.s32.totalorder %s46, 0
      %p295 = por %p293, %p294
      %s296 = ssub.s32 %s47, %s59
      %p297 = scmp.eq.s32.totalorder %s296, 0
      %s299 = sadd.s32 %s298, 1
      %s300 = scalar_select %p297, %s298, %s299
      %p303 = pneg %p297
      %p304 = scmp.eq.s32.totalorder %s40, 1
      %p305 = por %p303, %p304
      %p306 = scmp.ne.s32.totalorder %s298, %s301
      %p307 = scmp.eq.s32.totalorder %s40, 0
      %p308 = por %p306, %p307
      %p309 = scmp.ne.s32.totalorder %s298, %s301
      %p310 = scmp.eq.s32.totalorder %s45, 1
      %p311 = por %p309, %p310
      %p312 = scmp.ne.s32.totalorder %s301, %s302
      %p313 = scmp.eq.s32.totalorder %s45, 0
      %p314 = por %p312, %p313
      %p315 = scmp.ne.s32.totalorder %s301, %s302
      %p316 = scmp.eq.s32.totalorder %s46, 1
      %p317 = por %p315, %p316
      %p319 = scmp.ne.s32.totalorder %s302, %s318
      %p320 = scmp.eq.s32.totalorder %s46, 0
      %p321 = por %p319, %p320
      %s322 = ssub.s32 %s47, %s59
      %p323 = scmp.eq.s32.totalorder %s322, 0
      %s325 = sadd.s32 %s324, 1
      %s326 = scalar_select %p323, %s324, %s325
      %p329 = pneg %p323
      %p330 = scmp.eq.s32.totalorder %s40, 1
      %p331 = por %p329, %p330
      %p332 = scmp.ne.s32.totalorder %s324, %s327
      %p333 = scmp.eq.s32.totalorder %s40, 0
      %p334 = por %p332, %p333
      %p335 = scmp.ne.s32.totalorder %s324, %s327
      %p336 = scmp.eq.s32.totalorder %s45, 1
      %p337 = por %p335, %p336
      %p338 = scmp.ne.s32.totalorder %s327, %s328
      %p339 = scmp.eq.s32.totalorder %s45, 0
      %p340 = por %p338, %p339
      %p341 = scmp.ne.s32.totalorder %s327, %s328
      %p342 = scmp.eq.s32.totalorder %s46, 1
      %p343 = por %p341, %p342
      %p345 = scmp.ne.s32.totalorder %s328, %s344
      %p346 = scmp.eq.s32.totalorder %s46, 0
      %p347 = por %p345, %p346
      %s348 = ssub.s32 %s47, %s59
      %p349 = scmp.eq.s32.totalorder %s348, 0
      %s351 = sadd.s32 %s350, 1
      %s352 = scalar_select %p349, %s350, %s351
      %p355 = pneg %p349
      %p356 = scmp.eq.s32.totalorder %s40, 1
      %p357 = por %p355, %p356
      %p358 = scmp.ne.s32.totalorder %s350, %s353
      %p359 = scmp.eq.s32.totalorder %s40, 0
      %p360 = por %p358, %p359
      %p361 = scmp.ne.s32.totalorder %s350, %s353
      %p362 = scmp.eq.s32.totalorder %s45, 1
      %p363 = por %p361, %p362
      %p364 = scmp.ne.s32.totalorder %s353, %s354
      %p365 = scmp.eq.s32.totalorder %s45, 0
      %p366 = por %p364, %p365
      %p367 = scmp.ne.s32.totalorder %s353, %s354
      %p368 = scmp.eq.s32.totalorder %s46, 1
      %p369 = por %p367, %p368
      %p371 = scmp.ne.s32.totalorder %s354, %s370
      %p372 = scmp.eq.s32.totalorder %s46, 0
      %p373 = por %p371, %p372
      %s374 = ssub.s32 %s47, %s59
      %p375 = scmp.eq.s32.totalorder %s374, 0
      %s377 = sadd.s32 %s376, 1
      %s378 = scalar_select %p375, %s376, %s377
      %p381 = pneg %p375
      %p382 = scmp.eq.s32.totalorder %s40, 1
      %p383 = por %p381, %p382
      %p384 = scmp.ne.s32.totalorder %s376, %s379
      %p385 = scmp.eq.s32.totalorder %s40, 0
      %p386 = por %p384, %p385
      %p387 = scmp.ne.s32.totalorder %s376, %s379
      %p388 = scmp.eq.s32.totalorder %s45, 1
      %p389 = por %p387, %p388
      %p390 = scmp.ne.s32.totalorder %s379, %s380
      %p391 = scmp.eq.s32.totalorder %s45, 0
      %p392 = por %p390, %p391
      %p393 = scmp.ne.s32.totalorder %s379, %s380
      %p394 = scmp.eq.s32.totalorder %s46, 1
      %p395 = por %p393, %p394
      %p397 = scmp.ne.s32.totalorder %s380, %s396
      %p398 = scmp.eq.s32.totalorder %s46, 0
      %p399 = por %p397, %p398
      %p400 = scmp.le.s32.totalorder 1, %s40
      %p401 = scmp.lt.s32.totalorder %s40, 3
      %p402 = pnand %p400, %p401
      %p403 = pneg %p402
      // Predicated region
      $region9: #{tpu_custom_call.1} parent=5 // pred_check
        _
      $region10: #{tpu_custom_call.1} parent=5 // pred_check_branch
        %405 = sbr.rel (%p402) target = $region12
      $region11: #{tpu_custom_call.1} parent=5 // pred_region
        %s406 = ssub.s32 %s40, 1
        // Predicated region
        $region13: #{tpu_custom_call.1} parent=11 // pred_check
          %p407 = pneg %p208
        $region14: #{tpu_custom_call.1} parent=11 // pred_check_branch
          %409 = sbr.rel (%p407) target = $region16
        $region15: #{tpu_custom_call.1} parent=11 // pred_region
          %s410 = smul.u32 2, %s50
          %p411 = scmp.lt.s32.totalorder %s410, 1
          %s412 = scalar_select %p411, %s410, 1
          %s413 = scalar_lea.vmem %s5, %s412
          %s414 = smul.u32 2, %s50
        $region16: #{tpu_custom_call.1} parent=11 // pred_fallthru
          _
        // Predicated region
        $region17: #{tpu_custom_call.1} parent=11 // pred_check
          %p415 = pneg %p234
        $region18: #{tpu_custom_call.1} parent=11 // pred_check_branch
          %417 = sbr.rel (%p415) target = $region20
        $region19: #{tpu_custom_call.1} parent=11 // pred_region
          %s418 = smul.u32 2, %s50
          %420 = vsyncadd [#allocation9], 0
          %s421 = scalar_lea.hbm %s6, %s418
          %s423 = sshll.u32 %s421, 4
          %s424 = int_to_ptr.hbm [resolvable:$true] %s423
          %s425 = sshll.u32 [#allocation10], 4
          %s426 = int_to_ptr.vmem [resolvable:$true] %s425
          %428 = dma.hbm_to_vmem [thread:$0]  %s424, 32, %s426, [#allocation9]
        $region20: #{tpu_custom_call.1} parent=11 // pred_fallthru
          _
        // Predicated region
        $region21: #{tpu_custom_call.1} parent=11 // pred_check
          %p429 = pneg %p260
        $region22: #{tpu_custom_call.1} parent=11 // pred_check_branch
          %431 = sbr.rel (%p429) target = $region24
        $region23: #{tpu_custom_call.1} parent=11 // pred_region
          %s432 = smul.u32 2, %s50
          %p433 = scmp.lt.s32.totalorder %s432, 1
          %s434 = scalar_select %p433, %s432, 1
          %s435 = scalar_lea.vmem %s7, %s434
          %s436 = smul.u32 2, %s50
        $region24: #{tpu_custom_call.1} parent=11 // pred_fallthru
          _
      $region12: #{tpu_custom_call.1} parent=5 // pred_fallthru
        _
      %p437 = scmp.lt.s32.totalorder %s40, 2
      // Predicated region
      $region25: #{tpu_custom_call.1} parent=5 // pred_check
        %p438 = pneg %p437
      $region26: #{tpu_custom_call.1} parent=5 // pred_check_branch
        %440 = sbr.rel (%p438) target = $region28
      $region27: #{tpu_custom_call.1} parent=5 // pred_region
        // Predicated region
        $region29: #{tpu_custom_call.1} parent=27 // pred_check
          %p441 = pneg %p72
        $region30: #{tpu_custom_call.1} parent=27 // pred_check_branch
          %443 = sbr.rel (%p441) target = $region32
        $region31: #{tpu_custom_call.1} parent=27 // pred_region
          %s444 = sand.u32 %s62, 1
          %s445 = scalar_lea.sflag [#allocation3], %s444
          %s446 = sand.u32 %s62, 1
          %s447 = scalar_lea.vmem [#allocation2], %s446
          %449 = vsyncadd %s445, 0
          %s450 = scalar_lea.hbm %s0, %s47
          %s452 = sshll.u32 %s450, 4
          %s453 = int_to_ptr.hbm [resolvable:$true] %s452
          %s454 = sshll.u32 %s447, 4
          %s455 = int_to_ptr.vmem [resolvable:$true] %s454
          %457 = dma.hbm_to_vmem [thread:$0]  %s453, 16, %s455, %s445
        $region32: #{tpu_custom_call.1} parent=27 // pred_fallthru
          _
        // Predicated region
        $region33: #{tpu_custom_call.1} parent=27 // pred_check
          %p458 = pneg %p98
        $region34: #{tpu_custom_call.1} parent=27 // pred_check_branch
          %460 = sbr.rel (%p458) target = $region36
        $region35: #{tpu_custom_call.1} parent=27 // pred_region
          %s461 = sand.u32 %s40, 1
          %s462 = scalar_lea.sflag [#allocation6], %s461
          %s463 = sand.u32 %s88, 1
          %s464 = scalar_lea.vmem [#allocation5], %s463
          %466 = vsyncadd %s462, 0
          %s467 = scalar_lea.hbm %s1, %s47
          %s469 = sshll.u32 %s467, 4
          %s470 = int_to_ptr.hbm [resolvable:$true] %s469
          %s471 = sshll.u32 %s464, 4
          %s472 = int_to_ptr.vmem [resolvable:$true] %s471
          %474 = dma.hbm_to_vmem [thread:$0]  %s470, 16, %s472, %s462
        $region36: #{tpu_custom_call.1} parent=27 // pred_fallthru
          _
        // Predicated region
        $region37: #{tpu_custom_call.1} parent=27 // pred_check
          %p475 = pneg %p124
        $region38: #{tpu_custom_call.1} parent=27 // pred_check_branch
          %477 = sbr.rel (%p475) target = $region40
        $region39: #{tpu_custom_call.1} parent=27 // pred_region
          %s478 = sand.u32 %s40, 1
          %s479 = scalar_lea.sflag [#allocation6], %s478
          %s480 = sand.u32 %s114, 1
          %s481 = scalar_lea.vmem [#allocation7], %s480
          %483 = vsyncadd %s479, 0
          %s484 = scalar_lea.hbm %s2, %s47
          %s486 = sshll.u32 %s484, 4
          %s487 = int_to_ptr.hbm [resolvable:$true] %s486
          %s488 = sshll.u32 %s481, 4
          %s489 = int_to_ptr.vmem [resolvable:$true] %s488
          %491 = dma.hbm_to_vmem [thread:$0]  %s487, 16, %s489, %s479
        $region40: #{tpu_custom_call.1} parent=27 // pred_fallthru
          _
        // Predicated region
        $region41: #{tpu_custom_call.1} parent=27 // pred_check
          %p492 = pneg %p150
        $region42: #{tpu_custom_call.1} parent=27 // pred_check_branch
          %494 = sbr.rel (%p492) target = $region44
        $region43: #{tpu_custom_call.1} parent=27 // pred_region
          %p495 = scmp.lt.s32.totalorder %s47, 1
          %s496 = scalar_select %p495, %s47, 1
          %s497 = scalar_lea.vmem %s3, %s496
        $region44: #{tpu_custom_call.1} parent=27 // pred_fallthru
          _
        // Predicated region
        $region45: #{tpu_custom_call.1} parent=27 // pred_check
          %p498 = pneg %p176
        $region46: #{tpu_custom_call.1} parent=27 // pred_check_branch
          %500 = sbr.rel (%p498) target = $region48
        $region47: #{tpu_custom_call.1} parent=27 // pred_region
          %s501 = sand.u32 %s40, 1
          %s502 = scalar_lea.sflag [#allocation9], %s501
          %s503 = sand.u32 %s166, 1
          %s504 = scalar_lea.vmem [#allocation8], %s503
          %506 = vsyncadd %s502, 0
          %s507 = scalar_lea.hbm %s4, %s47
          %s509 = sshll.u32 %s507, 4
          %s510 = int_to_ptr.hbm [resolvable:$true] %s509
          %s511 = sshll.u32 %s504, 4
          %s512 = int_to_ptr.vmem [resolvable:$true] %s511
          %514 = dma.hbm_to_vmem [thread:$0]  %s510, 16, %s512, %s502
        $region48: #{tpu_custom_call.1} parent=27 // pred_fallthru
          _
        // Predicated region
        $region49: #{tpu_custom_call.1} parent=27 // pred_check
          %p515 = pneg %p282
        $region50: #{tpu_custom_call.1} parent=27 // pred_check_branch
          %517 = sbr.rel (%p515) target = $region52
        $region51: #{tpu_custom_call.1} parent=27 // pred_region
          %s518 = sand.u32 %s272, 1
          %s519 = scalar_lea.sflag [#allocation12], %s518
          %s520 = sand.u32 %s272, 1
          %s521 = smul.addr %s520, 128
          %s522 = scalar_lea.vmem [#allocation11], %s521
          %s523 = smul.u32 32, %s48
          %525 = vsyncadd %s519, 0
          %s526 = smul.addr %s523, 2
          %s527 = sadd.s32 %s47, %s526
          %s528 = smul.addr %s527, 4
          %s529 = scalar_lea.hbm %s8, %s528
          %s530 = sshll.u32 %s529, 4
          %s531 = int_to_ptr.hbm [resolvable:$true] %s530
          %s532 = sshll.u32 %s522, 4
          %s533 = int_to_ptr.vmem [resolvable:$true] %s532
          %538 = dma.hbm_to_vmem [thread:$0]  %s531, 2048, %s533, %s519, 128, 64, 4
        $region52: #{tpu_custom_call.1} parent=27 // pred_fallthru
          _
      $region28: #{tpu_custom_call.1} parent=5 // pred_fallthru
        _
      %p539 = scmp.le.s32.totalorder 1, %s40
      %p540 = scmp.lt.s32.totalorder %s40, 3
      %p541 = pnand %p539, %p540
      %p542 = pneg %p541
      // Predicated region
      $region53: #{tpu_custom_call.1} parent=5 // pred_check
        _
      $region54: #{tpu_custom_call.1} parent=5 // pred_check_branch
        %544 = sbr.rel (%p541) target = $region56
      $region55: #{tpu_custom_call.1} parent=5 // pred_region
        %s545 = ssub.s32 %s40, 1
        %s546 = sand.u32 %s65, 1
        %s547 = scalar_lea.sflag [#allocation3], %s546
        %s548 = sand.u32 %s65, 1
        %s549 = scalar_lea.vmem [#allocation2], %s548
        // Predicated region
        $region57: #{tpu_custom_call.1} parent=55 // pred_check
          %p550 = pneg %p78
        $region58: #{tpu_custom_call.1} parent=55 // pred_check_branch
          %552 = sbr.rel (%p550) target = $region60
        $region59: #{tpu_custom_call.1} parent=55 // pred_region
          %554 = dma.done %s547, 16
        $region60: #{tpu_custom_call.1} parent=55 // pred_fallthru
          _
        %s555 = sand.u32 %s45, 1
        %s556 = scalar_lea.sflag [#allocation6], %s555
        %s557 = sand.u32 %s91, 1
        %s558 = scalar_lea.vmem [#allocation5], %s557
        // Predicated region
        $region61: #{tpu_custom_call.1} parent=55 // pred_check
          %p559 = pneg %p104
        $region62: #{tpu_custom_call.1} parent=55 // pred_check_branch
          %561 = sbr.rel (%p559) target = $region64
        $region63: #{tpu_custom_call.1} parent=55 // pred_region
          %563 = dma.done %s556, 16
        $region64: #{tpu_custom_call.1} parent=55 // pred_fallthru
          _
        %s564 = sand.u32 %s45, 1
        %s565 = scalar_lea.sflag [#allocation6], %s564
        %s566 = sand.u32 %s117, 1
        %s567 = scalar_lea.vmem [#allocation7], %s566
        // Predicated region
        $region65: #{tpu_custom_call.1} parent=55 // pred_check
          %p568 = pneg %p130
        $region66: #{tpu_custom_call.1} parent=55 // pred_check_branch
          %570 = sbr.rel (%p568) target = $region68
        $region67: #{tpu_custom_call.1} parent=55 // pred_region
          %572 = dma.done %s565, 16
        $region68: #{tpu_custom_call.1} parent=55 // pred_fallthru
          _
        %s573 = sand.u32 %s45, 1
        %s574 = scalar_lea.sflag [#allocation9], %s573
        %s575 = sand.u32 %s169, 1
        %s576 = scalar_lea.vmem [#allocation8], %s575
        // Predicated region
        $region69: #{tpu_custom_call.1} parent=55 // pred_check
          %p577 = pneg %p182
        $region70: #{tpu_custom_call.1} parent=55 // pred_check_branch
          %579 = sbr.rel (%p577) target = $region72
        $region71: #{tpu_custom_call.1} parent=55 // pred_region
          %581 = dma.done %s574, 16
        $region72: #{tpu_custom_call.1} parent=55 // pred_fallthru
          _
        // Predicated region
        $region73: #{tpu_custom_call.1} parent=55 // pred_check
          %p582 = pneg %p234
        $region74: #{tpu_custom_call.1} parent=55 // pred_check_branch
          %584 = sbr.rel (%p582) target = $region76
        $region75: #{tpu_custom_call.1} parent=55 // pred_region
          %586 = dma.done [#allocation9], 32
        $region76: #{tpu_custom_call.1} parent=55 // pred_fallthru
          _
        %s587 = sand.u32 %s275, 1
        %s588 = scalar_lea.sflag [#allocation12], %s587
        %s589 = sand.u32 %s275, 1
        %s590 = smul.addr %s589, 128
        %s591 = scalar_lea.vmem [#allocation11], %s590
        // Predicated region
        $region77: #{tpu_custom_call.1} parent=55 // pred_check
          %p592 = pneg %p288
        $region78: #{tpu_custom_call.1} parent=55 // pred_check_branch
          %594 = sbr.rel (%p592) target = $region80
        $region79: #{tpu_custom_call.1} parent=55 // pred_region
          %596 = dma.done %s588, 2048
        $region80: #{tpu_custom_call.1} parent=55 // pred_fallthru
          _
        %s597 = sand.u32 %s65, 1
        %s598 = scalar_lea.sflag [#allocation3], %s597
        %s599 = sand.u32 %s65, 1
        %s600 = scalar_lea.vmem [#allocation2], %s599
        %p601 = pneg %p78
        %p602 = pneg %p75
        %s603 = sand.u32 %s45, 1
        %s604 = scalar_lea.sflag [#allocation6], %s603
        %s605 = sand.u32 %s91, 1
        %s606 = scalar_lea.vmem [#allocation5], %s605
        %p607 = pneg %p104
        %p608 = pneg %p101
        %s609 = sand.u32 %s45, 1
        %s610 = scalar_lea.sflag [#allocation6], %s609
        %s611 = sand.u32 %s117, 1
        %s612 = scalar_lea.vmem [#allocation7], %s611
        %p613 = pneg %p130
        %p614 = pneg %p127
        %p615 = scmp.lt.s32.totalorder %s49, 1
        %s616 = scalar_select %p615, %s49, 1
        %s617 = scalar_lea.vmem %s3, %s616
        %p618 = pneg %p156
        %p619 = pneg %p153
        %s620 = sand.u32 %s45, 1
        %s621 = scalar_lea.sflag [#allocation9], %s620
        %s622 = sand.u32 %s169, 1
        %s623 = scalar_lea.vmem [#allocation8], %s622
        %p624 = pneg %p182
        %p625 = pneg %p179
        %s626 = smul.u32 2, %s50
        %p627 = scmp.lt.s32.totalorder %s626, 1
        %s628 = scalar_select %p627, %s626, 1
        %s629 = scalar_lea.vmem %s5, %s628
        %p630 = pneg %p208
        %p631 = pneg %p205
        %p632 = pneg %p234
        %p633 = pneg %p231
        %s634 = smul.u32 2, %s50
        %p635 = scmp.lt.s32.totalorder %s634, 1
        %s636 = scalar_select %p635, %s634, 1
        %s637 = scalar_lea.vmem %s7, %s636
        %p638 = pneg %p260
        %p639 = pneg %p257
        %s640 = sand.u32 %s275, 1
        %s641 = scalar_lea.sflag [#allocation12], %s640
        %s642 = sand.u32 %s275, 1
        %s643 = smul.addr %s642, 128
        %s644 = scalar_lea.vmem [#allocation11], %s643
        %p645 = pneg %p288
        %p646 = pneg %p285
        %p647 = pneg %p314
        %p648 = pneg %p311
        %s649 = sand.u32 %s301, 1
        %s650 = scalar_lea.sflag [#allocation4], %s649
        %s651 = sand.u32 %s301, 1
        %s652 = scalar_lea.vmem [#allocation13], %s651
        %p653 = pneg %p340
        %p654 = pneg %p337
        %s655 = sand.u32 %s45, 1
        %s656 = scalar_lea.sflag [#allocation15], %s655
        %s657 = sand.u32 %s327, 1
        %s658 = scalar_lea.vmem [#allocation14], %s657
        %p659 = pneg %p366
        %p660 = pneg %p363
        %s661 = sand.u32 %s45, 1
        %s662 = scalar_lea.sflag [#allocation15], %s661
        %s663 = sand.u32 %s353, 1
        %s664 = scalar_lea.vmem [#allocation16], %s663
        %p665 = pneg %p392
        %p666 = pneg %p389
        %s667 = sand.u32 %s379, 1
        %s668 = scalar_lea.sflag [#allocation18], %s667
        %s669 = sand.u32 %s379, 1
        %s670 = scalar_lea.vmem [#allocation17], %s669
        %p671 = scmp.lt.s32.totalorder %s49, 1
        %s672 = scalar_select %p671, %s49, 1
        %s673 = scalar_lea.vmem %s3, %s672
        %s674 = smul.u32 2, %s50
        %p675 = scmp.lt.s32.totalorder %s674, 1
        %s676 = scalar_select %p675, %s674, 1
        %s677 = scalar_lea.vmem %s5, %s676
        %s678 = smul.u32 2, %s50
        %s679 = smul.u32 2, %s50
        %s680 = smul.u32 2, %s50
        %p681 = scmp.lt.s32.totalorder %s680, 1
        %s682 = scalar_select %p681, %s680, 1
        %s683 = scalar_lea.vmem %s7, %s682
        %s684 = smul.u32 2, %s50
        %s685 = smul.u32 32, %s50
        %p686 = scmp.eq.s32.totalorder %s50, 0
        // Predicated region
        $region81: #{tpu_custom_call.1} parent=55 // pred_check
          %p687 = pneg %p686
        $region82: #{tpu_custom_call.1} parent=55 // pred_check_branch
          %689 = sbr.rel (%p687) target = $region84
        $region83: #{tpu_custom_call.1} parent=55 // pred_region
          %v690 = vld [vmem:[%s549] sm:$0x1]
          %v691 = vld [vmem:[%s558] sm:$0x1]
          %v692 = vsub.f32 %v691, %v690
          %v693 = vmul.f32 %v692, 0.05
          %v694 = vadd.f32 %v690, %v693
          %695 = vst [vmem:[%s658] sm:$0x1] %v694
          %v696 = vmul.f32 %v694, 0.75
          %v697 = vadd.f32 %v696, 0.3
          %698 = vst [vmem:[%s652] sm:$0x1] %v697
          %v699 = vld [vmem:[%s673] sm:$0x1]
          %v700 = vsub.f32 0.0, %v699
          %v701 = vld [vmem:[%s567] sm:$0x1]
          %v702 = vmul.f32 %v701, 0.1
          %v703 = vadd.f32 %v700, %v702
          %v704 = vmul.f32 %v703, 0.05
          %v705 = vadd.f32 %v699, %v704
          %706 = vst [vmem:[%s664] sm:$0x1] %v705
          %v707 = vld [vmem:[%s576] sm:$0x1]
          %v708 = vmul.f32 %v707, 0.01
          %v709 = vsub.f32 %v707, %v708
          %v710 = vmul.f32 %v705, 0.1
          %v711 = vadd.f32 %v709, %v710
          %712 = vst [vmem:[%s670] sm:$0x1] %v711
        $region84: #{tpu_custom_call.1} parent=55 // pred_fallthru
          _
        %v713 = vld [vmem:[#allocation10] sm:$0x3]
        %v714 = vsub.f32 0.0, %v713
        %v715 = vld [vmem:[%s677] sm:$0x3]
        %v716 = vmul.f32 %v715, 0.1
        %v717 = vadd.f32 %v714, %v716
        %v718 = vmul.f32 %v717, 0.05
        %v719 = vadd.f32 %v713, %v718
        %v720 = vld [vmem:[%s683] sm:$0x3]
        %v721 = vmul.f32 %v720, 0.01
        %v722 = vsub.f32 %v720, %v721
        %v723 = vmul.f32 %v719, 0.1
        %v724 = vadd.f32 %v722, %v723
        %v725 = vld [vmem:[%s652] sm:$0x1]
        %v727 = vperm.slane %v724, 0
        %v728 = vperm.slane %v724, 1
        %v731 = vpack.c.bf16 %v727, %v727
        %v732 = vpack.c.bf16 %v728, %v728
        %v733 = vld [vmem:[%s591] sm:$0xf]
        %v734 = vld [vmem:[%s591 + $0x4] sm:$0xf]
        %v735 = vld [vmem:[%s591 + $0x8] sm:$0xf]
        %v736 = vld [vmem:[%s591 + $0xc] sm:$0xf]
        %v737 = vld [vmem:[%s591 + $0x10] sm:$0xf]
        %v738 = vld [vmem:[%s591 + $0x14] sm:$0xf]
        %v739 = vld [vmem:[%s591 + $0x18] sm:$0xf]
        %v740 = vld [vmem:[%s591 + $0x1c] sm:$0xf]
        %v741 = vld [vmem:[%s591 + $0x20] sm:$0xf]
        %v742 = vld [vmem:[%s591 + $0x24] sm:$0xf]
        %v743 = vld [vmem:[%s591 + $0x28] sm:$0xf]
        %v744 = vld [vmem:[%s591 + $0x2c] sm:$0xf]
        %v745 = vld [vmem:[%s591 + $0x30] sm:$0xf]
        %v746 = vld [vmem:[%s591 + $0x34] sm:$0xf]
        %v747 = vld [vmem:[%s591 + $0x38] sm:$0xf]
        %v748 = vld [vmem:[%s591 + $0x3c] sm:$0xf]
        %v749 = vld [vmem:[%s591 + $0x40] sm:$0xf]
        %v750 = vld [vmem:[%s591 + $0x44] sm:$0xf]
        %v751 = vld [vmem:[%s591 + $0x48] sm:$0xf]
        %v752 = vld [vmem:[%s591 + $0x4c] sm:$0xf]
        %v753 = vld [vmem:[%s591 + $0x50] sm:$0xf]
        %v754 = vld [vmem:[%s591 + $0x54] sm:$0xf]
        %v755 = vld [vmem:[%s591 + $0x58] sm:$0xf]
        %v756 = vld [vmem:[%s591 + $0x5c] sm:$0xf]
        %v757 = vld [vmem:[%s591 + $0x60] sm:$0xf]
        %v758 = vld [vmem:[%s591 + $0x64] sm:$0xf]
        %v759 = vld [vmem:[%s591 + $0x68] sm:$0xf]
        %v760 = vld [vmem:[%s591 + $0x6c] sm:$0xf]
        %v761 = vld [vmem:[%s591 + $0x70] sm:$0xf]
        %v762 = vld [vmem:[%s591 + $0x74] sm:$0xf]
        %v763 = vld [vmem:[%s591 + $0x78] sm:$0xf]
        %v764 = vld [vmem:[%s591 + $0x7c] sm:$0xf]
        %v797 = vunpack.c.l.b16 %v733
        %v798 = vunpack.c.l.b16 %v734
        %v799 = vunpack.c.l.b16 %v735
        %v800 = vunpack.c.l.b16 %v736
        %v801 = vunpack.c.l.b16 %v737
        %v802 = vunpack.c.l.b16 %v738
        %v803 = vunpack.c.l.b16 %v739
        %v804 = vunpack.c.l.b16 %v740
        %v805 = vunpack.c.l.b16 %v741
        %v806 = vunpack.c.l.b16 %v742
        %v807 = vunpack.c.l.b16 %v743
        %v808 = vunpack.c.l.b16 %v744
        %v809 = vunpack.c.l.b16 %v745
        %v810 = vunpack.c.l.b16 %v746
        %v811 = vunpack.c.l.b16 %v747
        %v812 = vunpack.c.l.b16 %v748
        %v813 = vunpack.c.l.b16 %v749
        %v814 = vunpack.c.l.b16 %v750
        %v815 = vunpack.c.l.b16 %v751
        %v816 = vunpack.c.l.b16 %v752
        %v817 = vunpack.c.l.b16 %v753
        %v818 = vunpack.c.l.b16 %v754
        %v819 = vunpack.c.l.b16 %v755
        %v820 = vunpack.c.l.b16 %v756
        %v821 = vunpack.c.l.b16 %v757
        %v822 = vunpack.c.l.b16 %v758
        %v823 = vunpack.c.l.b16 %v759
        %v824 = vunpack.c.l.b16 %v760
        %v825 = vunpack.c.l.b16 %v761
        %v826 = vunpack.c.l.b16 %v762
        %v827 = vunpack.c.l.b16 %v763
        %v828 = vunpack.c.l.b16 %v764
        %v829 = vpack.c.b16 %v798, %v797
        %v830 = vpack.c.b16 %v800, %v799
        %v831 = vpack.c.b16 %v802, %v801
        %v832 = vpack.c.b16 %v804, %v803
        %v833 = vpack.c.b16 %v806, %v805
        %v834 = vpack.c.b16 %v808, %v807
        %v835 = vpack.c.b16 %v810, %v809
        %v836 = vpack.c.b16 %v812, %v811
        %v837 = vpack.c.b16 %v814, %v813
        %v838 = vpack.c.b16 %v816, %v815
        %v839 = vpack.c.b16 %v818, %v817
        %v840 = vpack.c.b16 %v820, %v819
        %v841 = vpack.c.b16 %v822, %v821
        %v842 = vpack.c.b16 %v824, %v823
        %v843 = vpack.c.b16 %v826, %v825
        %v844 = vpack.c.b16 %v828, %v827
        %861 = vmatpush.bf16.msra.mxu0 %v836
        %862 = vmatpush.bf16.msra.mxu0 %v835
        %863 = vmatpush.bf16.msra.mxu0 %v834
        %864 = vmatpush.bf16.msra.mxu0 %v833
        %865 = vmatpush.bf16.msra.mxu0 %v832
        %866 = vmatpush.bf16.msra.mxu0 %v831
        %867 = vmatpush.bf16.msra.mxu0 %v830
        %868 = vmatpush.bf16.msra.mxu0 %v829
        %869 = vmatmul.bf16.gmra.mxu0 %v731
        %v870 = vpop.f32.mrf.mxu0
        %v871 = vadd.f32 0.0, %v870
        %v872 = vpop.f32.mrf.mxu0
        %873 = vdwg.mxu0
        %874 = vmatpush.bf16.msra.mxu0 %v844
        %875 = vmatpush.bf16.msra.mxu0 %v843
        %876 = vmatpush.bf16.msra.mxu0 %v842
        %877 = vmatpush.bf16.msra.mxu0 %v841
        %878 = vmatpush.bf16.msra.mxu0 %v840
        %879 = vmatpush.bf16.msra.mxu0 %v839
        %880 = vmatpush.bf16.msra.mxu0 %v838
        %881 = vmatpush.bf16.msra.mxu0 %v837
        %882 = vmatmul.bf16.gmra.mxu0 %v732
        %v883 = vpop.f32.mrf.mxu0
        %v884 = vadd.f32 %v871, %v883
        %v885 = vpop.f32.mrf.mxu0
        %886 = vdwg.mxu0
        %v887 = vadd.f32 %v725, %v884
        %888 = vst [vmem:[%s652] sm:$0x1] %v887
        %s889 = sand.u32 %s301, 1
        %s890 = scalar_lea.sflag [#allocation4], %s889
        %s891 = sand.u32 %s301, 1
        %s892 = scalar_lea.vmem [#allocation13], %s891
        %s893 = sand.u32 %s45, 1
        %s894 = scalar_lea.sflag [#allocation15], %s893
        %s895 = sand.u32 %s327, 1
        %s896 = scalar_lea.vmem [#allocation14], %s895
        %s897 = sand.u32 %s45, 1
        %s898 = scalar_lea.sflag [#allocation15], %s897
        %s899 = sand.u32 %s353, 1
        %s900 = scalar_lea.vmem [#allocation16], %s899
        %s901 = sand.u32 %s379, 1
        %s902 = scalar_lea.sflag [#allocation18], %s901
        %s903 = sand.u32 %s379, 1
        %s904 = scalar_lea.vmem [#allocation17], %s903
        // Predicated region
        $region85: #{tpu_custom_call.1} parent=55 // pred_check
          %p905 = pneg %p311
        $region86: #{tpu_custom_call.1} parent=55 // pred_check_branch
          %907 = sbr.rel (%p905) target = $region88
        $region87: #{tpu_custom_call.1} parent=55 // pred_region
          %909 = vsyncadd %s890, 0
          %s910 = scalar_lea.hbm %s9, %s49
          %s912 = sshll.u32 %s892, 4
          %s913 = int_to_ptr.vmem [resolvable:$true] %s912
          %s914 = sshll.u32 %s910, 4
          %s915 = int_to_ptr.hbm [resolvable:$true] %s914
          %917 = dma.vmem_to_hbm [thread:$0]  %s913, 16, %s915, %s890
        $region88: #{tpu_custom_call.1} parent=55 // pred_fallthru
          _
        // Predicated region
        $region89: #{tpu_custom_call.1} parent=55 // pred_check
          %p918 = pneg %p337
        $region90: #{tpu_custom_call.1} parent=55 // pred_check_branch
          %920 = sbr.rel (%p918) target = $region92
        $region91: #{tpu_custom_call.1} parent=55 // pred_region
          %922 = vsyncadd %s894, 0
          %s923 = scalar_lea.hbm %s10, %s49
          %s925 = sshll.u32 %s896, 4
          %s926 = int_to_ptr.vmem [resolvable:$true] %s925
          %s927 = sshll.u32 %s923, 4
          %s928 = int_to_ptr.hbm [resolvable:$true] %s927
          %930 = dma.vmem_to_hbm [thread:$0]  %s926, 16, %s928, %s894
        $region92: #{tpu_custom_call.1} parent=55 // pred_fallthru
          _
        // Predicated region
        $region93: #{tpu_custom_call.1} parent=55 // pred_check
          %p931 = pneg %p363
        $region94: #{tpu_custom_call.1} parent=55 // pred_check_branch
          %933 = sbr.rel (%p931) target = $region96
        $region95: #{tpu_custom_call.1} parent=55 // pred_region
          %935 = vsyncadd %s898, 0
          %s936 = scalar_lea.hbm %s11, %s49
          %s938 = sshll.u32 %s900, 4
          %s939 = int_to_ptr.vmem [resolvable:$true] %s938
          %s940 = sshll.u32 %s936, 4
          %s941 = int_to_ptr.hbm [resolvable:$true] %s940
          %943 = dma.vmem_to_hbm [thread:$0]  %s939, 16, %s941, %s898
        $region96: #{tpu_custom_call.1} parent=55 // pred_fallthru
          _
        // Predicated region
        $region97: #{tpu_custom_call.1} parent=55 // pred_check
          %p944 = pneg %p389
        $region98: #{tpu_custom_call.1} parent=55 // pred_check_branch
          %946 = sbr.rel (%p944) target = $region100
        $region99: #{tpu_custom_call.1} parent=55 // pred_region
          %948 = vsyncadd %s902, 0
          %s949 = scalar_lea.hbm %s12, %s49
          %s951 = sshll.u32 %s904, 4
          %s952 = int_to_ptr.vmem [resolvable:$true] %s951
          %s953 = sshll.u32 %s949, 4
          %s954 = int_to_ptr.hbm [resolvable:$true] %s953
          %956 = dma.vmem_to_hbm [thread:$0]  %s952, 16, %s954, %s902
        $region100: #{tpu_custom_call.1} parent=55 // pred_fallthru
          _
      $region56: #{tpu_custom_call.1} parent=5 // pred_fallthru
        _
      %p957 = scmp.le.s32.totalorder 2, %s40
      // Predicated region
      $region101: #{tpu_custom_call.1} parent=5 // pred_check
        %p958 = pneg %p957
      $region102: #{tpu_custom_call.1} parent=5 // pred_check_branch
        %960 = sbr.rel (%p958) target = $region104
      $region103: #{tpu_custom_call.1} parent=5 // pred_region
        %s961 = ssub.s32 %s40, 2
        // Predicated region
        $region105: #{tpu_custom_call.1} parent=103 // pred_check
          %p962 = pneg %p317
        $region106: #{tpu_custom_call.1} parent=103 // pred_check_branch
          %964 = sbr.rel (%p962) target = $region108
        $region107: #{tpu_custom_call.1} parent=103 // pred_region
          %s965 = sand.u32 %s302, 1
          %s966 = scalar_lea.sflag [#allocation4], %s965
          %s967 = sand.u32 %s302, 1
          %s968 = scalar_lea.vmem [#allocation13], %s967
          %970 = dma.done %s966, 16
        $region108: #{tpu_custom_call.1} parent=103 // pred_fallthru
          _
        // Predicated region
        $region109: #{tpu_custom_call.1} parent=103 // pred_check
          %p971 = pneg %p343
        $region110: #{tpu_custom_call.1} parent=103 // pred_check_branch
          %973 = sbr.rel (%p971) target = $region112
        $region111: #{tpu_custom_call.1} parent=103 // pred_region
          %s974 = sand.u32 %s46, 1
          %s975 = scalar_lea.sflag [#allocation15], %s974
          %s976 = sand.u32 %s328, 1
          %s977 = scalar_lea.vmem [#allocation14], %s976
          %979 = dma.done %s975, 16
        $region112: #{tpu_custom_call.1} parent=103 // pred_fallthru
          _
        // Predicated region
        $region113: #{tpu_custom_call.1} parent=103 // pred_check
          %p980 = pneg %p369
        $region114: #{tpu_custom_call.1} parent=103 // pred_check_branch
          %982 = sbr.rel (%p980) target = $region116
        $region115: #{tpu_custom_call.1} parent=103 // pred_region
          %s983 = sand.u32 %s46, 1
          %s984 = scalar_lea.sflag [#allocation15], %s983
          %s985 = sand.u32 %s354, 1
          %s986 = scalar_lea.vmem [#allocation16], %s985
          %988 = dma.done %s984, 16
        $region116: #{tpu_custom_call.1} parent=103 // pred_fallthru
          _
        // Predicated region
        $region117: #{tpu_custom_call.1} parent=103 // pred_check
          %p989 = pneg %p395
        $region118: #{tpu_custom_call.1} parent=103 // pred_check_branch
          %991 = sbr.rel (%p989) target = $region120
        $region119: #{tpu_custom_call.1} parent=103 // pred_region
          %s992 = sand.u32 %s380, 1
          %s993 = scalar_lea.sflag [#allocation18], %s992
          %s994 = sand.u32 %s380, 1
          %s995 = scalar_lea.vmem [#allocation17], %s994
          %997 = dma.done %s993, 16
        $region120: #{tpu_custom_call.1} parent=103 // pred_fallthru
          _
      $region104: #{tpu_custom_call.1} parent=5 // pred_fallthru
        _
    $region6: #{tpu_custom_call.1} parent=1 // loop_footer
      %s44 = sadd.s32 1, %s40
    $region7: #{tpu_custom_call.1} parent=1 // loop_footer_branch
      %39 = sbr.rel target = $region3
    $region8: #{tpu_custom_call.1} parent=1 // loop_exit
      _
    %998 = vsyncpa [#allocation3], 1
    %s999 = scalar_lea.sflag [#allocation3], 1
    %1000 = vsyncpa %s999, 1
    %1001 = vsyncpa [#allocation6], 1
    %s1002 = scalar_lea.sflag [#allocation6], 1
    %1003 = vsyncpa %s1002, 1
    %1004 = vsyncpa [#allocation9], 1
    %s1005 = scalar_lea.sflag [#allocation9], 1
    %1006 = vsyncpa %s1005, 1
    %1007 = vsyncpa [#allocation12], 1
    %s1008 = scalar_lea.sflag [#allocation12], 1
    %1009 = vsyncpa %s1008, 1
    %1010 = vsyncpa [#allocation4], 1
    %s1011 = scalar_lea.sflag [#allocation4], 1
    %1012 = vsyncpa %s1011, 1
    %1013 = vsyncpa [#allocation15], 1
    %s1014 = scalar_lea.sflag [#allocation15], 1
    %1015 = vsyncpa %s1014, 1
    %1016 = vsyncpa [#allocation18], 1
    %s1017 = scalar_lea.sflag [#allocation18], 1
    %1018 = vsyncpa %s1017, 1

</llo_original>
